<compile_context>
chip_gen: v7x
topology: tpu7x:2x2x1
jax: 0.10.0
libtpu: 0.0.40
codegen_flags: <defaults>
</compile_context>

<pallas_src>
import functools

import jax
import jax.numpy as jnp
from jax.experimental import pallas as pl
from jax.experimental.pallas import tpu as pltpu


# ----------------------------- Pallas kernels ------------------------------ #
def _gcc_layer1_kernel(*refs, tk: int, use_mask: bool):
    """Accumulate (A_hat @ X) over K blocks (X is VMEM-resident); at the last
    K step fuse @W1 + b1, ReLU, dropout-mask and @W2 into lane-dense G."""
    if use_mask:
        a_ref, x_ref, w1_ref, b1_ref, w2_ref, mask_ref, g_ref, acc_ref = refs
    else:
        a_ref, x_ref, w1_ref, b1_ref, w2_ref, g_ref, acc_ref = refs
        mask_ref = None

    k = pl.program_id(1)

    @pl.when(k == 0)
    def _():
        acc_ref[...] = jnp.zeros_like(acc_ref)

    # (TM, TK) bf16 @ (TK, Fp) bf16 -> f32 accumulate; X sliced in-kernel
    # from the resident (Np, Fp) buffer (no HBM re-streaming per row block).
    xk = x_ref[pl.ds(k * tk, tk), :]
    acc_ref[...] += jnp.dot(a_ref[...], xk, preferred_element_type=jnp.float32)

    @pl.when(k == pl.num_programs(1) - 1)
    def _():
        ax = acc_ref[...].astype(jnp.bfloat16)                    # (TM, Fp)
        h = jnp.dot(ax, w1_ref[...],
                    preferred_element_type=jnp.float32) + b1_ref[...]
        h = jnp.maximum(h, 0.0)                                   # ReLU
        if use_mask:
            h = h * mask_ref[...]                                 # dropout (0 or 1/(1-p))
        g_ref[...] = jnp.dot(h.astype(jnp.bfloat16), w2_ref[...],
                             preferred_element_type=jnp.float32
                             ).astype(g_ref.dtype)


def _gcc_layer2_kernel(a_ref, g_ref, b2_ref, o_ref, acc_ref, *, tk: int):
    """OUT = A_hat @ G + b2; G is VMEM-resident, A tiled over (row, K)."""
    k = pl.program_id(1)

    @pl.when(k == 0)
    def _():
        acc_ref[...] = jnp.zeros_like(acc_ref)

    gk_blk = g_ref[pl.ds(k * tk, tk), :]
    acc_ref[...] += jnp.dot(a_ref[...], gk_blk,
                            preferred_element_type=jnp.float32)

    @pl.when(k == pl.num_programs(1) - 1)
    def _():
        o_ref[...] = (acc_ref[...] + b2_ref[...]).astype(o_ref.dtype)


# ------------------------------- JAX glue ---------------------------------- #
def gcn_norm_adj(edge_index, num_nodes):
    """Dense D^{-1/2} (A + I) D^{-1/2}, matching torch_geometric gcn_norm.
    Duplicate edges are summed (same as un-coalesced edge_index in PyG)."""
    src, dst = edge_index[0], edge_index[1]
    a = jnp.zeros((num_nodes, num_nodes), jnp.float32)
    a = a.at[dst, src].add(1.0)                      # message src -> dst
    a = a + jnp.eye(num_nodes, dtype=jnp.float32)    # add self loops
    deg = a.sum(axis=1)
    dinv = jnp.where(deg > 0, jax.lax.rsqrt(deg), 0.0)
    return dinv[:, None] * a * dinv[None, :]


def _round_up(v, m):
    return ((v + m - 1) // m) * m


def _pad_to(arr, shape, dtype):
    out = jnp.zeros(shape, dtype)
    return out.at[tuple(slice(0, s) for s in arr.shape)].set(arr.astype(dtype))


def _pick_row_tile(n_p):
    """Largest of {512, 256, 128} dividing n_p while keeping >= 2 row blocks
    (so the 'parallel' axis can be sharded over v7x's two TensorCores)."""
    for cand in (512, 256, 128):
        if n_p % cand == 0 and n_p // cand >= 2:
            return cand
    return min(n_p, 128)


def _pick_k_tile(n_p):
    """Largest of {512, 256, 128} dividing n_p (>=256 fills the 256-wide MXU)."""
    for cand in (512, 256, 128):
        if n_p % cand == 0:
            return cand
    return min(n_p, 128)


def gcc_forward(x, edge_index, params, *, training=False, p=0.5, rng=None):
    w1, b1, w2, b2 = params
    n, f = x.shape
    h = w1.shape[1]
    c = w2.shape[1]

    # Padded sizes: node dim to 128, feature dims lane-dense (128).
    n_p = _round_up(n, 128)
    f_p = _round_up(f, 128)
    h_p = _round_up(h, 128)
    c_p = _round_up(c, 128)

    tm = _pick_row_tile(n_p)     # row-block ("parallel")
    tk = _pick_k_tile(n_p)       # reduction-block ("arbitrary", last)
    gi = n_p // tm
    gk = n_p // tk

    a_hat = gcn_norm_adj(edge_index, n)

    # bf16 MXU operands (f32 accumulation in-kernel), f32 biases.
    a_p = _pad_to(a_hat, (n_p, n_p), jnp.bfloat16)
    x_p = _pad_to(x, (n_p, f_p), jnp.bfloat16)
    w1_p = _pad_to(w1, (f_p, h_p), jnp.bfloat16)
    b1_p = _pad_to(b1.reshape(1, h), (1, h_p), jnp.float32)
    w2_p = _pad_to(w2, (h_p, c_p), jnp.bfloat16)
    b2_p = _pad_to(b2.reshape(1, c), (1, c_p), jnp.float32)

    # Dropout: keep/scale mask built host-side (no in-kernel PRNG -> portable,
    # tile-independent, no threshold overflow as p -> 1).
    use_mask = bool(training) and p > 0.0
    if use_mask:
        if rng is None:
            rng = jax.random.PRNGKey(0)
        keep = jax.random.bernoulli(rng, max(1.0 - float(p), 0.0), (n, h))
        scale = 0.0 if p >= 1.0 else 1.0 / (1.0 - float(p))
        mask = jnp.where(keep, jnp.float32(scale), jnp.float32(0.0))
        mask_p = _pad_to(mask, (n_p, h_p), jnp.float32)

    cparams = pltpu.CompilerParams(
        dimension_semantics=("parallel", "arbitrary"),
        vmem_limit_bytes=64 * 1024 * 1024)

    # ---- Kernel 1: G = dropout(relu((A@X)@W1 + b1)) @ W2  (lane-dense bf16) --
    in_specs1 = [
        pl.BlockSpec((tm, tk), lambda i, k: (i, k)),        # A_hat tile
        pl.BlockSpec((n_p, f_p), lambda i, k: (0, 0)),      # X (VMEM-resident)
        pl.BlockSpec((f_p, h_p), lambda i, k: (0, 0)),      # W1
        pl.BlockSpec((1, h_p), lambda i, k: (0, 0)),        # b1
        pl.BlockSpec((h_p, c_p), lambda i, k: (0, 0)),      # W2
    ]
    args1 = [a_p, x_p, w1_p, b1_p, w2_p]
    if use_mask:
        in_specs1.append(pl.BlockSpec((tm, h_p), lambda i, k: (i, 0)))
        args1.append(mask_p)

    g_pad = pl.pallas_call(
        functools.partial(_gcc_layer1_kernel, tk=tk, use_mask=use_mask),
        out_shape=jax.ShapeDtypeStruct((n_p, c_p), jnp.bfloat16),
        grid_spec=pltpu.PrefetchScalarGridSpec(
            num_scalar_prefetch=0,
            grid=(gi, gk),
            in_specs=in_specs1,
            out_specs=pl.BlockSpec((tm, c_p), lambda i, k: (i, 0)),
            scratch_shapes=[pltpu.VMEM((tm, f_p), jnp.float32)],
        ),
        compiler_params=cparams,
    )(*args1)

    # ---- Kernel 2: OUT = A_hat @ G + b2 (G VMEM-resident) --------------------
    out_pad = pl.pallas_call(
        functools.partial(_gcc_layer2_kernel, tk=tk),
        out_shape=jax.ShapeDtypeStruct((n_p, c_p), jnp.float32),
        grid_spec=pltpu.PrefetchScalarGridSpec(
            num_scalar_prefetch=0,
            grid=(gi, gk),
            in_specs=[
                pl.BlockSpec((tm, tk), lambda i, k: (i, k)),     # A_hat tile
                pl.BlockSpec((n_p, c_p), lambda i, k: (0, 0)),   # G (resident)
                pl.BlockSpec((1, c_p), lambda i, k: (0, 0)),     # b2
            ],
            out_specs=pl.BlockSpec((tm, c_p), lambda i, k: (i, 0)),
            scratch_shapes=[pltpu.VMEM((tm, c_p), jnp.float32)],
        ),
        compiler_params=cparams,
    )(a_p, g_pad, b2_p)

    return out_pad[:n, :c]


def init_params(key, num_features, hidden_channels, num_classes):
    """Deterministic glorot-uniform weights, zero biases (GCNConv defaults)."""
    k1, k2 = jax.random.split(key)

    def glorot(k, shape):
        lim = (6.0 / (shape[0] + shape[1])) ** 0.5
        return jax.random.uniform(k, shape, jnp.float32, -lim, lim)

    w1 = glorot(k1, (num_features, hidden_channels))
    b1 = jnp.zeros((hidden_channels,), jnp.float32)
    w2 = glorot(k2, (hidden_channels, num_classes))
    b2 = jnp.zeros((num_classes,), jnp.float32)
    return (w1, b1, w2, b2)


def gcc_reference(x, edge_index, params, *, match_kernel_precision=False):
    """Pure-JAX reference (eval mode).  With match_kernel_precision=True the
    matmul operands are rounded to bf16 (f32 accumulation) like the kernel."""
    w1, b1, w2, b2 = params
    a = gcn_norm_adj(edge_index, x.shape[0])
    cast = (lambda t: t.astype(jnp.bfloat16)) if match_kernel_precision \
        else (lambda t: t)
    ax = jnp.dot(cast(a), cast(x), preferred_element_type=jnp.float32)
    h = jnp.dot(cast(ax), cast(w1), preferred_element_type=jnp.float32) + b1
    h = jnp.maximum(h, 0.0)
    g = jnp.dot(cast(h), cast(w2), preferred_element_type=jnp.float32)
    return jnp.dot(cast(a), cast(g), preferred_element_type=jnp.float32) + b2


# --------------------------------- main ------------------------------------ #
if __name__ == "__main__":
    # nodes, num_features, hidden_channels, num_classes, edges
    N, F, H, C, E = 256, 16, 32, 7, 1024

    key = jax.random.PRNGKey(0)
    kx, ks, ko, kp, kd = jax.random.split(key, 5)

    x = jax.random.normal(kx, (N, F), jnp.float32)
    src = jax.random.randint(ks, (E,), 0, N)
    off = jax.random.randint(ko, (E,), 1, N)        # guarantees no self loops
    dst = (src + off) % N
    edge_index = jnp.stack([src, dst]).astype(jnp.int32)   # (2, E)

    params = init_params(kp, F, H, C)

    # Eval-mode forward (F.dropout(training=False) is the identity).
    out = gcc_forward(x, edge_index, params, training=False)
    out = jax.block_until_ready(out)
    assert out.shape == (N, C)

    # Tight check vs a reference with matching bf16 operand rounding.
    ref_bf16 = gcc_reference(x, edge_index, params, match_kernel_precision=True)
    assert jnp.allclose(out, ref_bf16, atol=2e-2, rtol=2e-2), \
        float(jnp.max(jnp.abs(out - ref_bf16)))

    # Looser check vs the pure-f32 semantic reference (bf16 rounding error only).
    ref_f32 = gcc_reference(x, edge_index, params)
    assert jnp.allclose(out, ref_f32, atol=1e-1, rtol=1e-1), \
        float(jnp.max(jnp.abs(out - ref_f32)))

    # Training-mode path (masked dropout, 1/(1-p) scaling) runs and is finite.
    out_tr = gcc_forward(x, edge_index, params, training=True, rng=kd)
    out_tr = jax.block_until_ready(out_tr)
    assert out_tr.shape == (N, C)
    assert bool(jnp.all(jnp.isfinite(out_tr)))

    print("KERNEL_OK")
</pallas_src>

<mosaic_0001>
module attributes {stable_mosaic.version = 11 : i64} {
  func.func @_gcc_layer1_kernel(%arg0: i32, %arg1: i32, %arg2: memref<128x256xbf16, #tpu.memory_space<vmem>>, %arg3: memref<256x128xbf16, #tpu.memory_space<vmem>>, %arg4: memref<128x128xbf16, #tpu.memory_space<vmem>>, %arg5: memref<1x128xf32, #tpu.memory_space<vmem>>, %arg6: memref<128x128xbf16, #tpu.memory_space<vmem>>, %arg7: memref<128x128xbf16, #tpu.memory_space<vmem>>, %arg8: memref<128x128xf32, #tpu.memory_space<vmem>>) attributes {dimension_semantics = [#tpu.dimension_semantics<parallel>, #tpu.dimension_semantics<arbitrary>], iteration_bounds = array<i64: 2, 1>, scalar_prefetch = 0 : i64, scratch_operands = 1 : i64, tpu.core_type = #tpu.core_type<tc>, window_params = [{transform_indices = @transform_0, window_bounds = array<i64: 128, 256>}, {pipeline_mode = #tpu.pipeline_mode<synchronous>, transform_indices = @transform_1, window_bounds = array<i64: 256, 128>}, {pipeline_mode = #tpu.pipeline_mode<synchronous>, transform_indices = @transform_2, window_bounds = array<i64: 128, 128>}, {pipeline_mode = #tpu.pipeline_mode<synchronous>, transform_indices = @transform_3, window_bounds = array<i64: 1, 128>}, {pipeline_mode = #tpu.pipeline_mode<synchronous>, transform_indices = @transform_4, window_bounds = array<i64: 128, 128>}, {transform_indices = @transform_5, window_bounds = array<i64: 128, 128>}]} {
    %c0_i32 = arith.constant 0 : i32
    %0 = arith.cmpi eq, %arg1, %c0_i32 : i32
    %1 = arith.extui %0 : i1 to i32
    %c0_i32_0 = arith.constant 0 : i32
    %2 = arith.cmpi ne, %1, %c0_i32_0 : i32
    scf.if %2 {
      %cst_9 = arith.constant 0.000000e+00 : f32
      %14 = vector.broadcast %cst_9 : f32 to vector<128x128xf32>
      %c0_10 = arith.constant 0 : index
      %c0_11 = arith.constant 0 : index
      %15 = vector.load %arg8[%c0_10, %c0_11] : memref<128x128xf32, #tpu.memory_space<vmem>>, vector<128x128xf32>
      tpu.vector_store %arg8[%c0_10, %c0_11], %14 {strides = array<i32>} : memref<128x128xf32, #tpu.memory_space<vmem>>, vector<128x128xf32>,
    } else {
    }
    %c256_i32 = arith.constant 256 : i32
    %3 = arith.muli %arg1, %c256_i32 : i32
    %4 = arith.index_cast %3 : i32 to index
    %c0 = arith.constant 0 : index
    %5 = vector.load %arg3[%4, %c0] : memref<256x128xbf16, #tpu.memory_space<vmem>>, vector<256x128xbf16>
    %c0_1 = arith.constant 0 : index
    %c0_2 = arith.constant 0 : index
    %6 = vector.load %arg8[%c0_1, %c0_2] : memref<128x128xf32, #tpu.memory_space<vmem>>, vector<128x128xf32>
    %c0_3 = arith.constant 0 : index
    %c0_4 = arith.constant 0 : index
    %7 = vector.load %arg2[%c0_3, %c0_4] : memref<128x256xbf16, #tpu.memory_space<vmem>>, vector<128x256xbf16>
    %cst = arith.constant dense<0.000000e+00> : vector<128x128xf32>
    %8 = tpu.matmul %7, %5, %cst {dimension_numbers = #tpu.dot_dimension_numbers<[1], [0], [0], [1], [0, 0, 1, 1], [], []>} : vector<128x256xbf16>, vector<256x128xbf16>, vector<128x128xf32> -> vector<128x128xf32>
    %9 = arith.addf %6, %8 : vector<128x128xf32>
    %c0_5 = arith.constant 0 : index
    %c0_6 = arith.constant 0 : index
    %10 = vector.load %arg8[%c0_5, %c0_6] : memref<128x128xf32, #tpu.memory_space<vmem>>, vector<128x128xf32>
    tpu.vector_store %arg8[%c0_5, %c0_6], %9 {strides = array<i32>} : memref<128x128xf32, #tpu.memory_space<vmem>>, vector<128x128xf32>,
    %c0_i32_7 = arith.constant 0 : i32
    %11 = arith.cmpi eq, %arg1, %c0_i32_7 : i32
    %12 = arith.extui %11 : i1 to i32
    %c0_i32_8 = arith.constant 0 : i32
    %13 = arith.cmpi ne, %12, %c0_i32_8 : i32
    scf.if %13 {
      %c0_9 = arith.constant 0 : index
      %c0_10 = arith.constant 0 : index
      %14 = vector.load %arg8[%c0_9, %c0_10] : memref<128x128xf32, #tpu.memory_space<vmem>>, vector<128x128xf32>
      %15 = arith.truncf %14 : vector<128x128xf32> to vector<128x128xbf16>
      %c0_11 = arith.constant 0 : index
      %c0_12 = arith.constant 0 : index
      %16 = vector.load %arg4[%c0_11, %c0_12] : memref<128x128xbf16, #tpu.memory_space<vmem>>, vector<128x128xbf16>
      %cst_13 = arith.constant dense<0.000000e+00> : vector<128x128xf32>
      %17 = tpu.matmul %15, %16, %cst_13 {dimension_numbers = #tpu.dot_dimension_numbers<[1], [0], [0], [1], [0, 0, 1, 1], [], []>} : vector<128x128xbf16>, vector<128x128xbf16>, vector<128x128xf32> -> vector<128x128xf32>
      %c0_14 = arith.constant 0 : index
      %c0_15 = arith.constant 0 : index
      %18 = vector.load %arg5[%c0_14, %c0_15] : memref<1x128xf32, #tpu.memory_space<vmem>>, vector<1x128xf32>
      %19 = vector.broadcast %18 : vector<1x128xf32> to vector<128x128xf32>
      %20 = arith.addf %17, %19 : vector<128x128xf32>
      %cst_16 = arith.constant 0.000000e+00 : f32
      %21 = vector.broadcast %cst_16 : f32 to vector<128x128xf32>
      %22 = arith.maximumf %20, %21 : vector<128x128xf32>
      %23 = arith.truncf %22 : vector<128x128xf32> to vector<128x128xbf16>
      %c0_17 = arith.constant 0 : index
      %c0_18 = arith.constant 0 : index
      %24 = vector.load %arg6[%c0_17, %c0_18] : memref<128x128xbf16, #tpu.memory_space<vmem>>, vector<128x128xbf16>
      %cst_19 = arith.constant dense<0.000000e+00> : vector<128x128xf32>
      %25 = tpu.matmul %23, %24, %cst_19 {dimension_numbers = #tpu.dot_dimension_numbers<[1], [0], [0], [1], [0, 0, 1, 1], [], []>} : vector<128x128xbf16>, vector<128x128xbf16>, vector<128x128xf32> -> vector<128x128xf32>
      %26 = arith.truncf %25 : vector<128x128xf32> to vector<128x128xbf16>
      %c0_20 = arith.constant 0 : index
      %c0_21 = arith.constant 0 : index
      %27 = vector.load %arg7[%c0_20, %c0_21] : memref<128x128xbf16, #tpu.memory_space<vmem>>, vector<128x128xbf16>
      tpu.vector_store %arg7[%c0_20, %c0_21], %26 {strides = array<i32>} : memref<128x128xbf16, #tpu.memory_space<vmem>>, vector<128x128xbf16>,
    } else {
    }
    return
  }
  func.func @transform_0(%arg0: i32, %arg1: i32) -> (i32, i32) {
    %c0_i32 = arith.constant 0 : i32
    return %arg0, %arg1 : i32, i32
  }
  func.func @transform_1(%arg0: i32, %arg1: i32) -> (i32, i32) {
    %c0_i32 = arith.constant 0 : i32
    %c0_i32_0 = arith.constant 0 : i32
    %c0_i32_1 = arith.constant 0 : i32
    return %c0_i32, %c0_i32_0 : i32, i32
  }
  func.func @transform_2(%arg0: i32, %arg1: i32) -> (i32, i32) {
    %c0_i32 = arith.constant 0 : i32
    %c0_i32_0 = arith.constant 0 : i32
    %c0_i32_1 = arith.constant 0 : i32
    return %c0_i32, %c0_i32_0 : i32, i32
  }
  func.func @transform_3(%arg0: i32, %arg1: i32) -> (i32, i32) {
    %c0_i32 = arith.constant 0 : i32
    %c0_i32_0 = arith.constant 0 : i32
    %c0_i32_1 = arith.constant 0 : i32
    return %c0_i32, %c0_i32_0 : i32, i32
  }
  func.func @transform_4(%arg0: i32, %arg1: i32) -> (i32, i32) {
    %c0_i32 = arith.constant 0 : i32
    %c0_i32_0 = arith.constant 0 : i32
    %c0_i32_1 = arith.constant 0 : i32
    return %c0_i32, %c0_i32_0 : i32, i32
  }
  func.func @transform_5(%arg0: i32, %arg1: i32) -> (i32, i32) {
    %c0_i32 = arith.constant 0 : i32
    %c0_i32_0 = arith.constant 0 : i32
    return %arg0, %c0_i32 : i32, i32
  }
}

</mosaic_0001>

<llo_original>
// kernel: tpu_custom_call.1
$region0: #{tpu_custom_call.1}
  #allocation0 [shape = 'u32[]', space=smem, size = 0x4, offset = 0x4, fixed_abs, tag = 'smem constant byte address 0x4 - core index']
  #allocation1 [shape = 'u32[144,128]{1,0:T(1,128)}', space=vmem, size = 0x12000, scoped, tag = 'internal scratch']
  #allocation2 [shape = 'f32[128,128]{1,0:T(8,128)}', space=vmem, size = 0x10000, scoped, tag = 'scratch operand']
  %s0 = inlined_call_operand.hbm [shape: bf16[256,256], index: 0, kind: input, shape index: {}]
  %s1 = inlined_call_operand.hbm [shape: bf16[256,128], index: 1, kind: input, shape index: {}]
  %s2 = inlined_call_operand.hbm [shape: bf16[128,128], index: 2, kind: input, shape index: {}]
  %s3 = inlined_call_operand.hbm [shape: f32[1,128], index: 3, kind: input, shape index: {}]
  %s4 = inlined_call_operand.hbm [shape: bf16[128,128], index: 4, kind: input, shape index: {}]
  %s5 = inlined_call_operand.hbm [shape: bf16[256,128], index: 5, kind: output, shape index: {}]
  %s6 = sld [smem:[#allocation0]]
  $region81: #{tpu_custom_call.1} parent=0
    _
  %s8 = ssub.s32 1, %s6
  %s9 = scalar_select 0, %s8, %s6
  $region1: #{tpu_custom_call.1} parent=0
    #allocation3 [shape = 'u8[131072]{0}', space=vmem, size = 0x20000, scoped, tag = 'input window, operand 0']
    #allocation4 [shape = 's32[2]{0}', space=sflag, size = 0x8, scoped, tag = 'scoped memory for tpu_custom_call.1']
    #allocation5 [shape = 's32[2]{0}', space=sflag, size = 0x8, scoped, tag = 'scoped memory for tpu_custom_call.1']
    #allocation6 [shape = 'u8[65536]{0}', space=vmem, size = 0x10000, scoped, tag = 'input window, operand 1, single buffered']
    #allocation7 [shape = 's32[1]{0}', space=sflag, size = 0x4, scoped, tag = 'scoped memory for tpu_custom_call.1']
    #allocation8 [shape = 'u8[32768]{0}', space=vmem, size = 0x8000, scoped, tag = 'input window, operand 2, single buffered']
    #allocation9 [shape = 'u8[512]{0}', space=vmem, size = 0x400, scoped, tag = 'input window, operand 3, single buffered']
    #allocation10 [shape = 's32[1]{0}', space=sflag, size = 0x4, scoped, tag = 'scoped memory for tpu_custom_call.1']
    #allocation11 [shape = 'u8[32768]{0}', space=vmem, size = 0x8000, scoped, tag = 'input window, operand 4, single buffered']
    #allocation12 [shape = 'u8[65536]{0}', space=vmem, size = 0x10000, scoped, tag = 'output window, operand 0']
    %10 = vsyncpa [#allocation4], 0
    %s11 = scalar_lea.sflag [#allocation4], 1
    %12 = vsyncpa %s11, 0
    %13 = vsyncpa [#allocation7], 0
    %14 = vsyncpa [#allocation10], 0
    %15 = vsyncpa [#allocation5], 0
    %s16 = scalar_lea.sflag [#allocation5], 1
    %17 = vsyncpa %s16, 0
    loop: start=0, step=1, limit=4
    $region2: #{tpu_custom_call.1} parent=1 // loop_pre_header
      _
    $region3: #{tpu_custom_call.1} parent=1 // loop_header
      %s19 = sphi 0, %s23
      %p20 = scmp.ge.s32.totalorder %s19, 4
      %s26 = sphi 0, %s38
      %s27 = sphi 0, %s34
      %s28 = sphi 0, %s26
      %s29 = sphi 0, %s27
      %s30 = sphi 0, %s28
      %s31 = sphi 0, %s29
      %s43 = sphi 0, %s45
      %s46 = sphi 0, %s43
      %s47 = sphi 0, %s46
      %s63 = sphi 0, %s47
      %s67 = sphi 0, %s67
      %s69 = sphi 0, %s67
      %s70 = sphi 0, %s69
      %s84 = sphi 0, %s70
      %s88 = sphi 0, %s88
      %s90 = sphi 0, %s88
      %s91 = sphi 0, %s90
      %s105 = sphi 0, %s91
      %s109 = sphi 0, %s109
      %s111 = sphi 0, %s109
      %s112 = sphi 0, %s111
      %s126 = sphi 0, %s112
      %s130 = sphi 0, %s130
      %s132 = sphi 0, %s130
      %s133 = sphi 0, %s132
      %s147 = sphi 0, %s133
      %s153 = sphi 0, %s155
      %s156 = sphi 0, %s153
      %s157 = sphi 0, %s156
      %s173 = sphi 0, %s157
    $region4: #{tpu_custom_call.1} parent=1 // loop_header_branch
      %22 = sbr.rel (%p20) target = $region8
    $region5: #{tpu_custom_call.1} parent=1 // loop_body
      %s24 = ssub.s32 %s19, 1
      %s25 = ssub.s32 %s19, 2
      %s32 = sadd.s32 1, %s27
      %p33 = scmp.ge.s32.totalorder %s32, 1
      %s34 = scalar_select %p33, 0, %s32
      %s35 = sadd.s32 1, %s26
      %s36 = scalar_select %p33, %s35, %s26
      %p37 = scmp.ge.s32.totalorder %s36, 2
      %s38 = scalar_select %p37, 0, %s36
      %s39 = ssub.s32 %s26, %s38
      %s40 = ssub.s32 %s27, %s34
      %s41 = sor.u32 %s39, %s40
      %p42 = scmp.eq.s32.totalorder %s41, 0
      %s44 = sadd.s32 %s43, 1
      %s45 = scalar_select %p42, %s43, %s44
      %p48 = pneg %p42
      %p49 = scmp.eq.s32.totalorder %s19, 1
      %p50 = por %p48, %p49
      %p51 = scmp.ne.s32.totalorder %s43, %s46
      %p52 = scmp.eq.s32.totalorder %s19, 0
      %p53 = por %p51, %p52
      %p54 = scmp.ne.s32.totalorder %s43, %s46
      %p55 = scmp.eq.s32.totalorder %s24, 1
      %p56 = por %p54, %p55
      %p57 = scmp.ne.s32.totalorder %s46, %s47
      %p58 = scmp.eq.s32.totalorder %s24, 0
      %p59 = por %p57, %p58
      %p60 = scmp.ne.s32.totalorder %s46, %s47
      %p61 = scmp.eq.s32.totalorder %s25, 1
      %p62 = por %p60, %p61
      %p64 = scmp.ne.s32.totalorder %s47, %s63
      %p65 = scmp.eq.s32.totalorder %s25, 0
      %p66 = por %p64, %p65
      %s68 = sadd.s32 %s67, 1
      %p71 = scmp.eq.s32.totalorder %s19, 1
      %p72 = scmp.ne.s32.totalorder %s67, %s69
      %p73 = scmp.eq.s32.totalorder %s19, 0
      %p74 = por %p72, %p73
      %p75 = scmp.ne.s32.totalorder %s67, %s69
      %p76 = scmp.eq.s32.totalorder %s24, 1
      %p77 = por %p75, %p76
      %p78 = scmp.ne.s32.totalorder %s69, %s70
      %p79 = scmp.eq.s32.totalorder %s24, 0
      %p80 = por %p78, %p79
      %p81 = scmp.ne.s32.totalorder %s69, %s70
      %p82 = scmp.eq.s32.totalorder %s25, 1
      %p83 = por %p81, %p82
      %p85 = scmp.ne.s32.totalorder %s70, %s84
      %p86 = scmp.eq.s32.totalorder %s25, 0
      %p87 = por %p85, %p86
      %s89 = sadd.s32 %s88, 1
      %p92 = scmp.eq.s32.totalorder %s19, 1
      %p93 = scmp.ne.s32.totalorder %s88, %s90
      %p94 = scmp.eq.s32.totalorder %s19, 0
      %p95 = por %p93, %p94
      %p96 = scmp.ne.s32.totalorder %s88, %s90
      %p97 = scmp.eq.s32.totalorder %s24, 1
      %p98 = por %p96, %p97
      %p99 = scmp.ne.s32.totalorder %s90, %s91
      %p100 = scmp.eq.s32.totalorder %s24, 0
      %p101 = por %p99, %p100
      %p102 = scmp.ne.s32.totalorder %s90, %s91
      %p103 = scmp.eq.s32.totalorder %s25, 1
      %p104 = por %p102, %p103
      %p106 = scmp.ne.s32.totalorder %s91, %s105
      %p107 = scmp.eq.s32.totalorder %s25, 0
      %p108 = por %p106, %p107
      %s110 = sadd.s32 %s109, 1
      %p113 = scmp.eq.s32.totalorder %s19, 1
      %p114 = scmp.ne.s32.totalorder %s109, %s111
      %p115 = scmp.eq.s32.totalorder %s19, 0
      %p116 = por %p114, %p115
      %p117 = scmp.ne.s32.totalorder %s109, %s111
      %p118 = scmp.eq.s32.totalorder %s24, 1
      %p119 = por %p117, %p118
      %p120 = scmp.ne.s32.totalorder %s111, %s112
      %p121 = scmp.eq.s32.totalorder %s24, 0
      %p122 = por %p120, %p121
      %p123 = scmp.ne.s32.totalorder %s111, %s112
      %p124 = scmp.eq.s32.totalorder %s25, 1
      %p125 = por %p123, %p124
      %p127 = scmp.ne.s32.totalorder %s112, %s126
      %p128 = scmp.eq.s32.totalorder %s25, 0
      %p129 = por %p127, %p128
      %s131 = sadd.s32 %s130, 1
      %p134 = scmp.eq.s32.totalorder %s19, 1
      %p135 = scmp.ne.s32.totalorder %s130, %s132
      %p136 = scmp.eq.s32.totalorder %s19, 0
      %p137 = por %p135, %p136
      %p138 = scmp.ne.s32.totalorder %s130, %s132
      %p139 = scmp.eq.s32.totalorder %s24, 1
      %p140 = por %p138, %p139
      %p141 = scmp.ne.s32.totalorder %s132, %s133
      %p142 = scmp.eq.s32.totalorder %s24, 0
      %p143 = por %p141, %p142
      %p144 = scmp.ne.s32.totalorder %s132, %s133
      %p145 = scmp.eq.s32.totalorder %s25, 1
      %p146 = por %p144, %p145
      %p148 = scmp.ne.s32.totalorder %s133, %s147
      %p149 = scmp.eq.s32.totalorder %s25, 0
      %p150 = por %p148, %p149
      %s151 = ssub.s32 %s26, %s38
      %p152 = scmp.eq.s32.totalorder %s151, 0
      %s154 = sadd.s32 %s153, 1
      %s155 = scalar_select %p152, %s153, %s154
      %p158 = pneg %p152
      %p159 = scmp.eq.s32.totalorder %s19, 1
      %p160 = por %p158, %p159
      %p161 = scmp.ne.s32.totalorder %s153, %s156
      %p162 = scmp.eq.s32.totalorder %s19, 0
      %p163 = por %p161, %p162
      %p164 = scmp.ne.s32.totalorder %s153, %s156
      %p165 = scmp.eq.s32.totalorder %s24, 1
      %p166 = por %p164, %p165
      %p167 = scmp.ne.s32.totalorder %s156, %s157
      %p168 = scmp.eq.s32.totalorder %s24, 0
      %p169 = por %p167, %p168
      %p170 = scmp.ne.s32.totalorder %s156, %s157
      %p171 = scmp.eq.s32.totalorder %s25, 1
      %p172 = por %p170, %p171
      %p174 = scmp.ne.s32.totalorder %s157, %s173
      %p175 = scmp.eq.s32.totalorder %s25, 0
      %p176 = por %p174, %p175
      %p177 = scmp.le.s32.totalorder 1, %s19
      %p178 = scmp.lt.s32.totalorder %s19, 3
      %p179 = pnand %p177, %p178
      %p180 = pneg %p179
      // Predicated region
      $region9: #{tpu_custom_call.1} parent=5 // pred_check
        _
      $region10: #{tpu_custom_call.1} parent=5 // pred_check_branch
        %182 = sbr.rel (%p179) target = $region12
      $region11: #{tpu_custom_call.1} parent=5 // pred_region
        %s183 = ssub.s32 %s19, 1
        // Predicated region
        $region13: #{tpu_custom_call.1} parent=11 // pred_check
          %p184 = pneg %p80
        $region14: #{tpu_custom_call.1} parent=11 // pred_check_branch
          %186 = sbr.rel (%p184) target = $region16
        $region15: #{tpu_custom_call.1} parent=11 // pred_region
          %s188 = ssub.s32 2048, 2048
          %189 = vsyncadd [#allocation7], %s188
          %s190 = sshll.u32 [#allocation6], 4
          %s191 = int_to_ptr.vmem [resolvable:$true] %s190
          %196 = dma.hbm_to_vmem [thread:$0]  %s1, 2048, %s191, [#allocation7], 64, 64, 4
        $region16: #{tpu_custom_call.1} parent=11 // pred_fallthru
          _
        // Predicated region
        $region17: #{tpu_custom_call.1} parent=11 // pred_check
          %p197 = pneg %p101
        $region18: #{tpu_custom_call.1} parent=11 // pred_check_branch
          %199 = sbr.rel (%p197) target = $region20
        $region19: #{tpu_custom_call.1} parent=11 // pred_region
          %s201 = ssub.s32 1024, 1024
          %202 = vsyncadd [#allocation7], %s201
          %s203 = sshll.u32 [#allocation8], 4
          %s204 = int_to_ptr.vmem [resolvable:$true] %s203
          %209 = dma.hbm_to_vmem [thread:$0]  %s2, 1024, %s204, [#allocation7], 64, 64, 4
        $region20: #{tpu_custom_call.1} parent=11 // pred_fallthru
          _
        // Predicated region
        $region21: #{tpu_custom_call.1} parent=11 // pred_check
          %p210 = pneg %p122
        $region22: #{tpu_custom_call.1} parent=11 // pred_check_branch
          %212 = sbr.rel (%p210) target = $region24
        $region23: #{tpu_custom_call.1} parent=11 // pred_region
          %s214 = ssub.s32 16, 16
          %215 = vsyncadd [#allocation10], %s214
          %s217 = sshll.u32 [#allocation9], 4
          %s218 = int_to_ptr.vmem [resolvable:$true] %s217
          %220 = dma.hbm_to_vmem [thread:$0]  %s3, 16, %s218, [#allocation10]
        $region24: #{tpu_custom_call.1} parent=11 // pred_fallthru
          _
        // Predicated region
        $region25: #{tpu_custom_call.1} parent=11 // pred_check
          %p221 = pneg %p143
        $region26: #{tpu_custom_call.1} parent=11 // pred_check_branch
          %223 = sbr.rel (%p221) target = $region28
        $region27: #{tpu_custom_call.1} parent=11 // pred_region
          %s225 = ssub.s32 1024, 1024
          %226 = vsyncadd [#allocation10], %s225
          %s227 = sshll.u32 [#allocation11], 4
          %s228 = int_to_ptr.vmem [resolvable:$true] %s227
          %233 = dma.hbm_to_vmem [thread:$0]  %s4, 1024, %s228, [#allocation10], 64, 64, 4
        $region28: #{tpu_custom_call.1} parent=11 // pred_fallthru
          _
      $region12: #{tpu_custom_call.1} parent=5 // pred_fallthru
        _
      %p234 = scmp.lt.s32.totalorder %s19, 2
      // Predicated region
      $region29: #{tpu_custom_call.1} parent=5 // pred_check
        %p235 = pneg %p234
      $region30: #{tpu_custom_call.1} parent=5 // pred_check_branch
        %237 = sbr.rel (%p235) target = $region32
      $region31: #{tpu_custom_call.1} parent=5 // pred_region
        // Predicated region
        $region33: #{tpu_custom_call.1} parent=31 // pred_check
          %p238 = pneg %p53
        $region34: #{tpu_custom_call.1} parent=31 // pred_check_branch
          %240 = sbr.rel (%p238) target = $region36
        $region35: #{tpu_custom_call.1} parent=31 // pred_region
          %s241 = sand.u32 %s43, 1
          %s242 = scalar_lea.sflag [#allocation4], %s241
          %s243 = sand.u32 %s43, 1
          %s244 = smul.addr %s243, 128
          %s245 = scalar_lea.vmem [#allocation3], %s244
          %s246 = smul.u32 16, %s26
          %s247 = smul.u32 2, %s27
          %s249 = ssub.s32 2048, 2048
          %250 = vsyncadd %s242, %s249
          %s251 = smul.addr %s246, 2
          %s252 = sadd.s32 %s247, %s251
          %s253 = smul.addr %s252, 64
          %s254 = scalar_lea.hbm %s0, %s253
          %s255 = sshll.u32 %s245, 4
          %s256 = int_to_ptr.vmem [resolvable:$true] %s255
          %261 = dma.hbm_to_vmem [thread:$0]  %s254, 2048, %s256, %s242, 128, 128, 8
        $region36: #{tpu_custom_call.1} parent=31 // pred_fallthru
          _
      $region32: #{tpu_custom_call.1} parent=5 // pred_fallthru
        _
      %p262 = scmp.le.s32.totalorder 1, %s19
      %p263 = scmp.lt.s32.totalorder %s19, 3
      %p264 = pnand %p262, %p263
      %p265 = pneg %p264
      // Predicated region
      $region37: #{tpu_custom_call.1} parent=5 // pred_check
        _
      $region38: #{tpu_custom_call.1} parent=5 // pred_check_branch
        %267 = sbr.rel (%p264) target = $region40
      $region39: #{tpu_custom_call.1} parent=5 // pred_region
        %s268 = ssub.s32 %s19, 1
        %s269 = sand.u32 %s46, 1
        %s270 = scalar_lea.sflag [#allocation4], %s269
        %s271 = sand.u32 %s46, 1
        %s272 = smul.addr %s271, 128
        %s273 = scalar_lea.vmem [#allocation3], %s272
        // Predicated region
        $region41: #{tpu_custom_call.1} parent=39 // pred_check
          %p274 = pneg %p59
        $region42: #{tpu_custom_call.1} parent=39 // pred_check_branch
          %276 = sbr.rel (%p274) target = $region44
        $region43: #{tpu_custom_call.1} parent=39 // pred_region
          %277 = dma.done %s270, 2048
        $region44: #{tpu_custom_call.1} parent=39 // pred_fallthru
          _
        // Predicated region
        $region45: #{tpu_custom_call.1} parent=39 // pred_check
          %p278 = pneg %p80
        $region46: #{tpu_custom_call.1} parent=39 // pred_check_branch
          %280 = sbr.rel (%p278) target = $region48
        $region47: #{tpu_custom_call.1} parent=39 // pred_region
          %281 = dma.done [#allocation7], 2048
        $region48: #{tpu_custom_call.1} parent=39 // pred_fallthru
          _
        // Predicated region
        $region49: #{tpu_custom_call.1} parent=39 // pred_check
          %p282 = pneg %p101
        $region50: #{tpu_custom_call.1} parent=39 // pred_check_branch
          %284 = sbr.rel (%p282) target = $region52
        $region51: #{tpu_custom_call.1} parent=39 // pred_region
          %285 = dma.done [#allocation7], 1024
        $region52: #{tpu_custom_call.1} parent=39 // pred_fallthru
          _
        // Predicated region
        $region53: #{tpu_custom_call.1} parent=39 // pred_check
          %p286 = pneg %p122
        $region54: #{tpu_custom_call.1} parent=39 // pred_check_branch
          %288 = sbr.rel (%p286) target = $region56
        $region55: #{tpu_custom_call.1} parent=39 // pred_region
          %289 = dma.done [#allocation10], 16
        $region56: #{tpu_custom_call.1} parent=39 // pred_fallthru
          _
        // Predicated region
        $region57: #{tpu_custom_call.1} parent=39 // pred_check
          %p290 = pneg %p143
        $region58: #{tpu_custom_call.1} parent=39 // pred_check_branch
          %292 = sbr.rel (%p290) target = $region60
        $region59: #{tpu_custom_call.1} parent=39 // pred_region
          %293 = dma.done [#allocation10], 1024
        $region60: #{tpu_custom_call.1} parent=39 // pred_fallthru
          _
        %s294 = sand.u32 %s46, 1
        %s295 = scalar_lea.sflag [#allocation4], %s294
        %s296 = sand.u32 %s46, 1
        %s297 = smul.addr %s296, 128
        %s298 = scalar_lea.vmem [#allocation3], %s297
        %p299 = pneg %p59
        %p300 = pneg %p56
        %p301 = pneg %p80
        %p302 = pneg %p77
        %p303 = pneg %p101
        %p304 = pneg %p98
        %p305 = pneg %p122
        %p306 = pneg %p119
        %p307 = pneg %p143
        %p308 = pneg %p140
        %p309 = pneg %p169
        %p310 = pneg %p166
        %s311 = sand.u32 %s156, 1
        %s312 = scalar_lea.sflag [#allocation5], %s311
        %s313 = sand.u32 %s156, 1
        %s314 = smul.addr %s313, 64
        %s315 = scalar_lea.vmem [#allocation12], %s314
        %s316 = smul.u32 16, %s28
        %s317 = smul.u32 2, %s29
        %s318 = smul.u32 16, %s28
        %p320 = scmp.eq.s32.totalorder %s29, 0
        // Predicated region
        $region61: #{tpu_custom_call.1} parent=39 // pred_check
          %p321 = pneg %p320
        $region62: #{tpu_custom_call.1} parent=39 // pred_check_branch
          %323 = sbr.rel (%p321) target = $region64
        $region63: #{tpu_custom_call.1} parent=39 // pred_region
          %324 = vst [vmem:[#allocation2] sm:$0xff] 0.0
          %325 = vst [vmem:[#allocation2 + $0x8] sm:$0xff] 0.0
          %326 = vst [vmem:[#allocation2 + $0x10] sm:$0xff] 0.0
          %327 = vst [vmem:[#allocation2 + $0x18] sm:$0xff] 0.0
          %328 = vst [vmem:[#allocation2 + $0x20] sm:$0xff] 0.0
          %329 = vst [vmem:[#allocation2 + $0x28] sm:$0xff] 0.0
          %330 = vst [vmem:[#allocation2 + $0x30] sm:$0xff] 0.0
          %331 = vst [vmem:[#allocation2 + $0x38] sm:$0xff] 0.0
          %332 = vst [vmem:[#allocation2 + $0x40] sm:$0xff] 0.0
          %333 = vst [vmem:[#allocation2 + $0x48] sm:$0xff] 0.0
          %334 = vst [vmem:[#allocation2 + $0x50] sm:$0xff] 0.0
          %335 = vst [vmem:[#allocation2 + $0x58] sm:$0xff] 0.0
          %336 = vst [vmem:[#allocation2 + $0x60] sm:$0xff] 0.0
          %337 = vst [vmem:[#allocation2 + $0x68] sm:$0xff] 0.0
          %338 = vst [vmem:[#allocation2 + $0x70] sm:$0xff] 0.0
          %339 = vst [vmem:[#allocation2 + $0x78] sm:$0xff] 0.0
        $region64: #{tpu_custom_call.1} parent=39 // pred_fallthru
          _
        %s340 = smul.u32 %s29, 256
        %s341 = sshra.s32 %s340, 3
        %s342 = sand.u32 %s340, 7
        %s343 = smul.addr %s341, 4
        %s344 = scalar_lea.vmem [#allocation6], %s343
        %v345 = vld [vmem:[%s344] sm:$0xf]
        %v346 = vld [vmem:[%s344 + $0x4] sm:$0xf]
        %v347 = vld [vmem:[%s344 + $0x8] sm:$0xf]
        %v348 = vld [vmem:[%s344 + $0xc] sm:$0xf]
        %v349 = vld [vmem:[%s344 + $0x10] sm:$0xf]
        %v350 = vld [vmem:[%s344 + $0x14] sm:$0xf]
        %v351 = vld [vmem:[%s344 + $0x18] sm:$0xf]
        %v352 = vld [vmem:[%s344 + $0x1c] sm:$0xf]
        %v353 = vld [vmem:[%s344 + $0x20] sm:$0xf]
        %v354 = vld [vmem:[%s344 + $0x24] sm:$0xf]
        %v355 = vld [vmem:[%s344 + $0x28] sm:$0xf]
        %v356 = vld [vmem:[%s344 + $0x2c] sm:$0xf]
        %v357 = vld [vmem:[%s344 + $0x30] sm:$0xf]
        %v358 = vld [vmem:[%s344 + $0x34] sm:$0xf]
        %v359 = vld [vmem:[%s344 + $0x38] sm:$0xf]
        %v360 = vld [vmem:[%s344 + $0x3c] sm:$0xf]
        %v361 = vld [vmem:[%s344 + $0x40] sm:$0xf]
        %v362 = vld [vmem:[%s344 + $0x44] sm:$0xf]
        %v363 = vld [vmem:[%s344 + $0x48] sm:$0xf]
        %v364 = vld [vmem:[%s344 + $0x4c] sm:$0xf]
        %v365 = vld [vmem:[%s344 + $0x50] sm:$0xf]
        %v366 = vld [vmem:[%s344 + $0x54] sm:$0xf]
        %v367 = vld [vmem:[%s344 + $0x58] sm:$0xf]
        %v368 = vld [vmem:[%s344 + $0x5c] sm:$0xf]
        %v369 = vld [vmem:[%s344 + $0x60] sm:$0xf]
        %v370 = vld [vmem:[%s344 + $0x64] sm:$0xf]
        %v371 = vld [vmem:[%s344 + $0x68] sm:$0xf]
        %v372 = vld [vmem:[%s344 + $0x6c] sm:$0xf]
        %v373 = vld [vmem:[%s344 + $0x70] sm:$0xf]
        %v374 = vld [vmem:[%s344 + $0x74] sm:$0xf]
        %v375 = vld [vmem:[%s344 + $0x78] sm:$0xf]
        %v376 = vld [vmem:[%s344 + $0x7c] sm:$0xf]
        %v377 = vld [vmem:[#allocation2] sm:$0xff]
        %v378 = vld [vmem:[#allocation2 + $0x8] sm:$0xff]
        %v379 = vld [vmem:[#allocation2 + $0x10] sm:$0xff]
        %v380 = vld [vmem:[#allocation2 + $0x18] sm:$0xff]
        %v381 = vld [vmem:[#allocation2 + $0x20] sm:$0xff]
        %v382 = vld [vmem:[#allocation2 + $0x28] sm:$0xff]
        %v383 = vld [vmem:[#allocation2 + $0x30] sm:$0xff]
        %v384 = vld [vmem:[#allocation2 + $0x38] sm:$0xff]
        %v385 = vld [vmem:[#allocation2 + $0x40] sm:$0xff]
        %v386 = vld [vmem:[#allocation2 + $0x48] sm:$0xff]
        %v387 = vld [vmem:[#allocation2 + $0x50] sm:$0xff]
        %v388 = vld [vmem:[#allocation2 + $0x58] sm:$0xff]
        %v389 = vld [vmem:[#allocation2 + $0x60] sm:$0xff]
        %v390 = vld [vmem:[#allocation2 + $0x68] sm:$0xff]
        %v391 = vld [vmem:[#allocation2 + $0x70] sm:$0xff]
        %v392 = vld [vmem:[#allocation2 + $0x78] sm:$0xff]
        %v393 = vld [vmem:[%s273] sm:$0xff]
        %v394 = vld [vmem:[%s273 + $0x8] sm:$0xff]
        %v395 = vld [vmem:[%s273 + $0x10] sm:$0xff]
        %v396 = vld [vmem:[%s273 + $0x18] sm:$0xff]
        %v397 = vld [vmem:[%s273 + $0x20] sm:$0xff]
        %v398 = vld [vmem:[%s273 + $0x28] sm:$0xff]
        %v399 = vld [vmem:[%s273 + $0x30] sm:$0xff]
        %v400 = vld [vmem:[%s273 + $0x38] sm:$0xff]
        %v401 = vld [vmem:[%s273 + $0x40] sm:$0xff]
        %v402 = vld [vmem:[%s273 + $0x48] sm:$0xff]
        %v403 = vld [vmem:[%s273 + $0x50] sm:$0xff]
        %v404 = vld [vmem:[%s273 + $0x58] sm:$0xff]
        %v405 = vld [vmem:[%s273 + $0x60] sm:$0xff]
        %v406 = vld [vmem:[%s273 + $0x68] sm:$0xff]
        %v407 = vld [vmem:[%s273 + $0x70] sm:$0xff]
        %v408 = vld [vmem:[%s273 + $0x78] sm:$0xff]
        %v425 = vunpack.c.l.b16 %v393
        %v426 = vunpack.c.h.b16 %v393
        %v427 = vunpack.c.l.b16 %v394
        %v428 = vunpack.c.h.b16 %v394
        %v429 = vunpack.c.l.b16 %v395
        %v430 = vunpack.c.h.b16 %v395
        %v431 = vunpack.c.l.b16 %v396
        %v432 = vunpack.c.h.b16 %v396
        %v433 = vunpack.c.l.b16 %v397
        %v434 = vunpack.c.h.b16 %v397
        %v435 = vunpack.c.l.b16 %v398
        %v436 = vunpack.c.h.b16 %v398
        %v437 = vunpack.c.l.b16 %v399
        %v438 = vunpack.c.h.b16 %v399
        %v439 = vunpack.c.l.b16 %v400
        %v440 = vunpack.c.h.b16 %v400
        %v441 = vunpack.c.l.b16 %v401
        %v442 = vunpack.c.h.b16 %v401
        %v443 = vunpack.c.l.b16 %v402
        %v444 = vunpack.c.h.b16 %v402
        %v445 = vunpack.c.l.b16 %v403
        %v446 = vunpack.c.h.b16 %v403
        %v447 = vunpack.c.l.b16 %v404
        %v448 = vunpack.c.h.b16 %v404
        %v449 = vunpack.c.l.b16 %v405
        %v450 = vunpack.c.h.b16 %v405
        %v451 = vunpack.c.l.b16 %v406
        %v452 = vunpack.c.h.b16 %v406
        %v453 = vunpack.c.l.b16 %v407
        %v454 = vunpack.c.h.b16 %v407
        %v455 = vunpack.c.l.b16 %v408
        %v456 = vunpack.c.h.b16 %v408
        %v457 = vpack.c.b16 %v427, %v425
        %v458 = vpack.c.b16 %v428, %v426
        %v459 = vpack.c.b16 %v431, %v429
        %v460 = vpack.c.b16 %v432, %v430
        %v461 = vpack.c.b16 %v435, %v433
        %v462 = vpack.c.b16 %v436, %v434
        %v463 = vpack.c.b16 %v439, %v437
        %v464 = vpack.c.b16 %v440, %v438
        %v465 = vpack.c.b16 %v443, %v441
        %v466 = vpack.c.b16 %v444, %v442
        %v467 = vpack.c.b16 %v447, %v445
        %v468 = vpack.c.b16 %v448, %v446
        %v469 = vpack.c.b16 %v451, %v449
        %v470 = vpack.c.b16 %v452, %v450
        %v471 = vpack.c.b16 %v455, %v453
        %v472 = vpack.c.b16 %v456, %v454
        %v521 = vunpack.c.l.b16 %v345
        %v522 = vunpack.c.l.b16 %v346
        %v523 = vunpack.c.l.b16 %v347
        %v524 = vunpack.c.l.b16 %v348
        %v525 = vunpack.c.l.b16 %v349
        %v526 = vunpack.c.l.b16 %v350
        %v527 = vunpack.c.l.b16 %v351
        %v528 = vunpack.c.l.b16 %v352
        %v529 = vunpack.c.l.b16 %v353
        %v530 = vunpack.c.l.b16 %v354
        %v531 = vunpack.c.l.b16 %v355
        %v532 = vunpack.c.l.b16 %v356
        %v533 = vunpack.c.l.b16 %v357
        %v534 = vunpack.c.l.b16 %v358
        %v535 = vunpack.c.l.b16 %v359
        %v536 = vunpack.c.l.b16 %v360
        %v537 = vunpack.c.l.b16 %v361
        %v538 = vunpack.c.l.b16 %v362
        %v539 = vunpack.c.l.b16 %v363
        %v540 = vunpack.c.l.b16 %v364
        %v541 = vunpack.c.l.b16 %v365
        %v542 = vunpack.c.l.b16 %v366
        %v543 = vunpack.c.l.b16 %v367
        %v544 = vunpack.c.l.b16 %v368
        %v545 = vunpack.c.l.b16 %v369
        %v546 = vunpack.c.l.b16 %v370
        %v547 = vunpack.c.l.b16 %v371
        %v548 = vunpack.c.l.b16 %v372
        %v549 = vunpack.c.l.b16 %v373
        %v550 = vunpack.c.l.b16 %v374
        %v551 = vunpack.c.l.b16 %v375
        %v552 = vunpack.c.l.b16 %v376
        %v553 = vpack.c.b16 %v522, %v521
        %v554 = vpack.c.b16 %v524, %v523
        %v555 = vpack.c.b16 %v526, %v525
        %v556 = vpack.c.b16 %v528, %v527
        %v557 = vpack.c.b16 %v530, %v529
        %v558 = vpack.c.b16 %v532, %v531
        %v559 = vpack.c.b16 %v534, %v533
        %v560 = vpack.c.b16 %v536, %v535
        %v561 = vpack.c.b16 %v538, %v537
        %v562 = vpack.c.b16 %v540, %v539
        %v563 = vpack.c.b16 %v542, %v541
        %v564 = vpack.c.b16 %v544, %v543
        %v565 = vpack.c.b16 %v546, %v545
        %v566 = vpack.c.b16 %v548, %v547
        %v567 = vpack.c.b16 %v550, %v549
        %v568 = vpack.c.b16 %v552, %v551
        %585 = vmatprep.subr.bf16.mxu0 0
        %586 = vmatpush1.bf16.msra.mxu0 %v553
        %587 = vmatprep.subr.bf16.mxu0 0
        %588 = vmatpush1.bf16.msra.mxu0 %v554
        %589 = vmatprep.subr.bf16.mxu0 0
        %590 = vmatpush1.bf16.msra.mxu0 %v555
        %591 = vmatprep.subr.bf16.mxu0 0
        %592 = vmatpush1.bf16.msra.mxu0 %v556
        %593 = vmatprep.subr.bf16.mxu0 0
        %594 = vmatpush1.bf16.msra.mxu0 %v557
        %595 = vmatprep.subr.bf16.mxu0 0
        %596 = vmatpush1.bf16.msra.mxu0 %v558
        %597 = vmatprep.subr.bf16.mxu0 0
        %598 = vmatpush1.bf16.msra.mxu0 %v559
        %599 = vmatprep.subr.bf16.mxu0 0
        %600 = vmatpush1.bf16.msra.mxu0 %v560
        %601 = vmatprep.subr.bf16.mxu0 0
        %602 = vmatpush1.bf16.msra.mxu0 %v561
        %603 = vmatprep.subr.bf16.mxu0 0
        %604 = vmatpush1.bf16.msra.mxu0 %v562
        %605 = vmatprep.subr.bf16.mxu0 0
        %606 = vmatpush1.bf16.msra.mxu0 %v563
        %607 = vmatprep.subr.bf16.mxu0 0
        %608 = vmatpush1.bf16.msra.mxu0 %v564
        %609 = vmatprep.subr.bf16.mxu0 0
        %610 = vmatpush1.bf16.msra.mxu0 %v565
        %611 = vmatprep.subr.bf16.mxu0 0
        %612 = vmatpush1.bf16.msra.mxu0 %v566
        %613 = vmatprep.subr.bf16.mxu0 0
        %614 = vmatpush1.bf16.msra.mxu0 %v567
        %615 = vmatprep.subr.bf16.mxu0 0
        %616 = vmatpush1.bf16.msra.mxu0 %v568
        %617 = vmatprep.mubr.bf16.mxu0 %v458
        %618 = vmatmul.mubr.bf16.gmra.mrb[0].mxu0 %v457
        %v619 = vpop.f32.mrb[0].mxu0
        %v620 = vadd.f32 0.0, %v619
        %v621 = vpop.f32.mrb[0].mxu0
        %v622 = vpop.f32.mrb[0].mxu0
        %v623 = vadd.f32 0.0, %v622
        %v624 = vpop.f32.mrb[0].mxu0
        %625 = vmatprep.mubr.bf16.mxu0 %v460
        %626 = vmatmul.mubr.bf16.gmra.mrb[0].mxu0 %v459
        %v627 = vpop.f32.mrb[0].mxu0
        %v628 = vadd.f32 0.0, %v627
        %v629 = vpop.f32.mrb[0].mxu0
        %v630 = vpop.f32.mrb[0].mxu0
        %v631 = vadd.f32 0.0, %v630
        %v632 = vpop.f32.mrb[0].mxu0
        %633 = vmatprep.mubr.bf16.mxu0 %v462
        %634 = vmatmul.mubr.bf16.gmra.mrb[0].mxu0 %v461
        %v635 = vpop.f32.mrb[0].mxu0
        %v636 = vadd.f32 0.0, %v635
        %v637 = vpop.f32.mrb[0].mxu0
        %v638 = vpop.f32.mrb[0].mxu0
        %v639 = vadd.f32 0.0, %v638
        %v640 = vpop.f32.mrb[0].mxu0
        %641 = vmatprep.mubr.bf16.mxu0 %v464
        %642 = vmatmul.mubr.bf16.gmra.mrb[0].mxu0 %v463
        %v643 = vpop.f32.mrb[0].mxu0
        %v644 = vadd.f32 0.0, %v643
        %v645 = vpop.f32.mrb[0].mxu0
        %v646 = vpop.f32.mrb[0].mxu0
        %v647 = vadd.f32 0.0, %v646
        %v648 = vpop.f32.mrb[0].mxu0
        %649 = vmatprep.mubr.bf16.mxu0 %v466
        %650 = vmatmul.mubr.bf16.gmra.mrb[0].mxu0 %v465
        %v651 = vpop.f32.mrb[0].mxu0
        %v652 = vadd.f32 0.0, %v651
        %v653 = vpop.f32.mrb[0].mxu0
        %v654 = vpop.f32.mrb[0].mxu0
        %v655 = vadd.f32 0.0, %v654
        %v656 = vpop.f32.mrb[0].mxu0
        %657 = vmatprep.mubr.bf16.mxu0 %v468
        %658 = vmatmul.mubr.bf16.gmra.mrb[0].mxu0 %v467
        %v659 = vpop.f32.mrb[0].mxu0
        %v660 = vadd.f32 0.0, %v659
        %v661 = vpop.f32.mrb[0].mxu0
        %v662 = vpop.f32.mrb[0].mxu0
        %v663 = vadd.f32 0.0, %v662
        %v664 = vpop.f32.mrb[0].mxu0
        %665 = vmatprep.mubr.bf16.mxu0 %v470
        %666 = vmatmul.mubr.bf16.gmra.mrb[0].mxu0 %v469
        %v667 = vpop.f32.mrb[0].mxu0
        %v668 = vadd.f32 0.0, %v667
        %v669 = vpop.f32.mrb[0].mxu0
        %v670 = vpop.f32.mrb[0].mxu0
        %v671 = vadd.f32 0.0, %v670
        %v672 = vpop.f32.mrb[0].mxu0
        %673 = vmatprep.mubr.bf16.mxu0 %v472
        %674 = vmatmul.mubr.bf16.gmra.mrb[0].mxu0 %v471
        %v675 = vpop.f32.mrb[0].mxu0
        %v676 = vadd.f32 0.0, %v675
        %v677 = vpop.f32.mrb[0].mxu0
        %v678 = vpop.f32.mrb[0].mxu0
        %v679 = vadd.f32 0.0, %v678
        %v680 = vpop.f32.mrb[0].mxu0
        %681 = vdwg.mxu0
        %v682 = vadd.f32 %v377, %v620
        %v683 = vadd.f32 %v378, %v623
        %v684 = vadd.f32 %v379, %v628
        %v685 = vadd.f32 %v380, %v631
        %v686 = vadd.f32 %v381, %v636
        %v687 = vadd.f32 %v382, %v639
        %v688 = vadd.f32 %v383, %v644
        %v689 = vadd.f32 %v384, %v647
        %v690 = vadd.f32 %v385, %v652
        %v691 = vadd.f32 %v386, %v655
        %v692 = vadd.f32 %v387, %v660
        %v693 = vadd.f32 %v388, %v663
        %v694 = vadd.f32 %v389, %v668
        %v695 = vadd.f32 %v390, %v671
        %v696 = vadd.f32 %v391, %v676
        %v697 = vadd.f32 %v392, %v679
        %698 = vst [vmem:[#allocation2] sm:$0xff] %v682
        %699 = vst [vmem:[#allocation2 + $0x8] sm:$0xff] %v683
        %700 = vst [vmem:[#allocation2 + $0x10] sm:$0xff] %v684
        %701 = vst [vmem:[#allocation2 + $0x18] sm:$0xff] %v685
        %702 = vst [vmem:[#allocation2 + $0x20] sm:$0xff] %v686
        %703 = vst [vmem:[#allocation2 + $0x28] sm:$0xff] %v687
        %704 = vst [vmem:[#allocation2 + $0x30] sm:$0xff] %v688
        %705 = vst [vmem:[#allocation2 + $0x38] sm:$0xff] %v689
        %706 = vst [vmem:[#allocation2 + $0x40] sm:$0xff] %v690
        %707 = vst [vmem:[#allocation2 + $0x48] sm:$0xff] %v691
        %708 = vst [vmem:[#allocation2 + $0x50] sm:$0xff] %v692
        %709 = vst [vmem:[#allocation2 + $0x58] sm:$0xff] %v693
        %710 = vst [vmem:[#allocation2 + $0x60] sm:$0xff] %v694
        %711 = vst [vmem:[#allocation2 + $0x68] sm:$0xff] %v695
        %712 = vst [vmem:[#allocation2 + $0x70] sm:$0xff] %v696
        %713 = vst [vmem:[#allocation2 + $0x78] sm:$0xff] %v697
        // Predicated region
        $region65: #{tpu_custom_call.1} parent=39 // pred_check
          %p714 = pneg %p320
        $region66: #{tpu_custom_call.1} parent=39 // pred_check_branch
          %716 = sbr.rel (%p714) target = $region68
        $region67: #{tpu_custom_call.1} parent=39 // pred_region
          %v717 = vld [vmem:[#allocation2] sm:$0xff]
          %v718 = vld [vmem:[#allocation2 + $0x8] sm:$0xff]
          %v719 = vld [vmem:[#allocation2 + $0x10] sm:$0xff]
          %v720 = vld [vmem:[#allocation2 + $0x18] sm:$0xff]
          %v721 = vld [vmem:[#allocation2 + $0x20] sm:$0xff]
          %v722 = vld [vmem:[#allocation2 + $0x28] sm:$0xff]
          %v723 = vld [vmem:[#allocation2 + $0x30] sm:$0xff]
          %v724 = vld [vmem:[#allocation2 + $0x38] sm:$0xff]
          %v725 = vld [vmem:[#allocation2 + $0x40] sm:$0xff]
          %v726 = vld [vmem:[#allocation2 + $0x48] sm:$0xff]
          %v727 = vld [vmem:[#allocation2 + $0x50] sm:$0xff]
          %v728 = vld [vmem:[#allocation2 + $0x58] sm:$0xff]
          %v729 = vld [vmem:[#allocation2 + $0x60] sm:$0xff]
          %v730 = vld [vmem:[#allocation2 + $0x68] sm:$0xff]
          %v731 = vld [vmem:[#allocation2 + $0x70] sm:$0xff]
          %v732 = vld [vmem:[#allocation2 + $0x78] sm:$0xff]
          %v733 = vpack.c.bf16 %v718, %v717
          %v734 = vpack.c.bf16 %v720, %v719
          %v735 = vpack.c.bf16 %v722, %v721
          %v736 = vpack.c.bf16 %v724, %v723
          %v737 = vpack.c.bf16 %v726, %v725
          %v738 = vpack.c.bf16 %v728, %v727
          %v739 = vpack.c.bf16 %v730, %v729
          %v740 = vpack.c.bf16 %v732, %v731
          %v741 = vld [vmem:[#allocation8] sm:$0xf]
          %v742 = vld [vmem:[#allocation8 + $0x4] sm:$0xf]
          %v743 = vld [vmem:[#allocation8 + $0x8] sm:$0xf]
          %v744 = vld [vmem:[#allocation8 + $0xc] sm:$0xf]
          %v745 = vld [vmem:[#allocation8 + $0x10] sm:$0xf]
          %v746 = vld [vmem:[#allocation8 + $0x14] sm:$0xf]
          %v747 = vld [vmem:[#allocation8 + $0x18] sm:$0xf]
          %v748 = vld [vmem:[#allocation8 + $0x1c] sm:$0xf]
          %v749 = vld [vmem:[#allocation8 + $0x20] sm:$0xf]
          %v750 = vld [vmem:[#allocation8 + $0x24] sm:$0xf]
          %v751 = vld [vmem:[#allocation8 + $0x28] sm:$0xf]
          %v752 = vld [vmem:[#allocation8 + $0x2c] sm:$0xf]
          %v753 = vld [vmem:[#allocation8 + $0x30] sm:$0xf]
          %v754 = vld [vmem:[#allocation8 + $0x34] sm:$0xf]
          %v755 = vld [vmem:[#allocation8 + $0x38] sm:$0xf]
          %v756 = vld [vmem:[#allocation8 + $0x3c] sm:$0xf]
          %v757 = vld [vmem:[#allocation9] sm:$0x1]
          %v759 = vlaneseq
          %v760 = vshrl.u32 %v759, 7
          %v761 = vsub.s32 0, %v760
          %v762 = vrot.slane %v757, %v761
          %v780 = vunpack.c.l.b16 %v741
          %v781 = vunpack.c.l.b16 %v742
          %v782 = vunpack.c.l.b16 %v743
          %v783 = vunpack.c.l.b16 %v744
          %v784 = vunpack.c.l.b16 %v745
          %v785 = vunpack.c.l.b16 %v746
          %v786 = vunpack.c.l.b16 %v747
          %v787 = vunpack.c.l.b16 %v748
          %v788 = vunpack.c.l.b16 %v749
          %v789 = vunpack.c.l.b16 %v750
          %v790 = vunpack.c.l.b16 %v751
          %v791 = vunpack.c.l.b16 %v752
          %v792 = vunpack.c.l.b16 %v753
          %v793 = vunpack.c.l.b16 %v754
          %v794 = vunpack.c.l.b16 %v755
          %v795 = vunpack.c.l.b16 %v756
          %v796 = vpack.c.b16 %v781, %v780
          %v797 = vpack.c.b16 %v783, %v782
          %v798 = vpack.c.b16 %v785, %v784
          %v799 = vpack.c.b16 %v787, %v786
          %v800 = vpack.c.b16 %v789, %v788
          %v801 = vpack.c.b16 %v791, %v790
          %v802 = vpack.c.b16 %v793, %v792
          %v803 = vpack.c.b16 %v795, %v794
          %812 = vmatprep.subr.bf16.mxu0 0
          %813 = vmatpush1.bf16.msra.mxu0 %v796
          %814 = vmatprep.subr.bf16.mxu0 0
          %815 = vmatpush1.bf16.msra.mxu0 %v797
          %816 = vmatprep.subr.bf16.mxu0 0
          %817 = vmatpush1.bf16.msra.mxu0 %v798
          %818 = vmatprep.subr.bf16.mxu0 0
          %819 = vmatpush1.bf16.msra.mxu0 %v799
          %820 = vmatprep.subr.bf16.mxu0 0
          %821 = vmatpush1.bf16.msra.mxu0 %v800
          %822 = vmatprep.subr.bf16.mxu0 0
          %823 = vmatpush1.bf16.msra.mxu0 %v801
          %824 = vmatprep.subr.bf16.mxu0 0
          %825 = vmatpush1.bf16.msra.mxu0 %v802
          %826 = vmatprep.subr.bf16.mxu0 0
          %827 = vmatpush1.bf16.msra.mxu0 %v803
          %828 = vmatprep.subr.bf16.mxu0 0
          %829 = vmatpush1.bf16.msra.mxu0 0
          %830 = vmatprep.subr.bf16.mxu0 0
          %831 = vmatpush1.bf16.msra.mxu0 0
          %832 = vmatprep.subr.bf16.mxu0 0
          %833 = vmatpush1.bf16.msra.mxu0 0
          %834 = vmatprep.subr.bf16.mxu0 0
          %835 = vmatpush1.bf16.msra.mxu0 0
          %836 = vmatprep.subr.bf16.mxu0 0
          %837 = vmatpush1.bf16.msra.mxu0 0
          %838 = vmatprep.subr.bf16.mxu0 0
          %839 = vmatpush1.bf16.msra.mxu0 0
          %840 = vmatprep.subr.bf16.mxu0 0
          %841 = vmatpush1.bf16.msra.mxu0 0
          %842 = vmatprep.subr.bf16.mxu0 0
          %843 = vmatpush1.bf16.msra.mxu0 0
          %844 = vmatprep.mubr.bf16.mxu0 0
          %845 = vmatmul.mubr.bf16.gmra.mrb[0].mxu0 %v733
          %v846 = vpop.f32.mrb[0].mxu0
          %v847 = vadd.f32 %v762, %v846
          %v848 = vpop.f32.mrb[0].mxu0
          %v849 = vpop.f32.mrb[0].mxu0
          %v850 = vadd.f32 %v762, %v849
          %v851 = vpop.f32.mrb[0].mxu0
          %852 = vmatprep.mubr.bf16.mxu0 0
          %853 = vmatmul.mubr.bf16.gmra.mrb[0].mxu0 %v734
          %v854 = vpop.f32.mrb[0].mxu0
          %v855 = vadd.f32 %v762, %v854
          %v856 = vpop.f32.mrb[0].mxu0
          %v857 = vpop.f32.mrb[0].mxu0
          %v858 = vadd.f32 %v762, %v857
          %v859 = vpop.f32.mrb[0].mxu0
          %860 = vmatprep.mubr.bf16.mxu0 0
          %861 = vmatmul.mubr.bf16.gmra.mrb[0].mxu0 %v735
          %v862 = vpop.f32.mrb[0].mxu0
          %v863 = vadd.f32 %v762, %v862
          %v864 = vpop.f32.mrb[0].mxu0
          %v865 = vpop.f32.mrb[0].mxu0
          %v866 = vadd.f32 %v762, %v865
          %v867 = vpop.f32.mrb[0].mxu0
          %868 = vmatprep.mubr.bf16.mxu0 0
          %869 = vmatmul.mubr.bf16.gmra.mrb[0].mxu0 %v736
          %v870 = vpop.f32.mrb[0].mxu0
          %v871 = vadd.f32 %v762, %v870
          %v872 = vpop.f32.mrb[0].mxu0
          %v873 = vpop.f32.mrb[0].mxu0
          %v874 = vadd.f32 %v762, %v873
          %v875 = vpop.f32.mrb[0].mxu0
          %876 = vmatprep.mubr.bf16.mxu0 0
          %877 = vmatmul.mubr.bf16.gmra.mrb[0].mxu0 %v737
          %v878 = vpop.f32.mrb[0].mxu0
          %v879 = vadd.f32 %v762, %v878
          %v880 = vpop.f32.mrb[0].mxu0
          %v881 = vpop.f32.mrb[0].mxu0
          %v882 = vadd.f32 %v762, %v881
          %v883 = vpop.f32.mrb[0].mxu0
          %884 = vmatprep.mubr.bf16.mxu0 0
          %885 = vmatmul.mubr.bf16.gmra.mrb[0].mxu0 %v738
          %v886 = vpop.f32.mrb[0].mxu0
          %v887 = vadd.f32 %v762, %v886
          %v888 = vpop.f32.mrb[0].mxu0
          %v889 = vpop.f32.mrb[0].mxu0
          %v890 = vadd.f32 %v762, %v889
          %v891 = vpop.f32.mrb[0].mxu0
          %892 = vmatprep.mubr.bf16.mxu0 0
          %893 = vmatmul.mubr.bf16.gmra.mrb[0].mxu0 %v739
          %v894 = vpop.f32.mrb[0].mxu0
          %v895 = vadd.f32 %v762, %v894
          %v896 = vpop.f32.mrb[0].mxu0
          %v897 = vpop.f32.mrb[0].mxu0
          %v898 = vadd.f32 %v762, %v897
          %v899 = vpop.f32.mrb[0].mxu0
          %900 = vmatprep.mubr.bf16.mxu0 0
          %901 = vmatmul.mubr.bf16.gmra.mrb[0].mxu0 %v740
          %v902 = vpop.f32.mrb[0].mxu0
          %v903 = vadd.f32 %v762, %v902
          %v904 = vpop.f32.mrb[0].mxu0
          %v905 = vpop.f32.mrb[0].mxu0
          %v906 = vadd.f32 %v762, %v905
          %v907 = vpop.f32.mrb[0].mxu0
          %908 = vdwg.mxu0
          %v909 = vmax.f32 %v847, 0.0
          %v910 = vmax.f32 %v850, 0.0
          %v911 = vmax.f32 %v855, 0.0
          %v912 = vmax.f32 %v858, 0.0
          %v913 = vmax.f32 %v863, 0.0
          %v914 = vmax.f32 %v866, 0.0
          %v915 = vmax.f32 %v871, 0.0
          %v916 = vmax.f32 %v874, 0.0
          %v917 = vmax.f32 %v879, 0.0
          %v918 = vmax.f32 %v882, 0.0
          %v919 = vmax.f32 %v887, 0.0
          %v920 = vmax.f32 %v890, 0.0
          %v921 = vmax.f32 %v895, 0.0
          %v922 = vmax.f32 %v898, 0.0
          %v923 = vmax.f32 %v903, 0.0
          %v924 = vmax.f32 %v906, 0.0
          %v925 = vpack.c.bf16 %v910, %v909
          %v926 = vpack.c.bf16 %v912, %v911
          %v927 = vpack.c.bf16 %v914, %v913
          %v928 = vpack.c.bf16 %v916, %v915
          %v929 = vpack.c.bf16 %v918, %v917
          %v930 = vpack.c.bf16 %v920, %v919
          %v931 = vpack.c.bf16 %v922, %v921
          %v932 = vpack.c.bf16 %v924, %v923
          %v933 = vld [vmem:[#allocation11] sm:$0xf]
          %v934 = vld [vmem:[#allocation11 + $0x4] sm:$0xf]
          %v935 = vld [vmem:[#allocation11 + $0x8] sm:$0xf]
          %v936 = vld [vmem:[#allocation11 + $0xc] sm:$0xf]
          %v937 = vld [vmem:[#allocation11 + $0x10] sm:$0xf]
          %v938 = vld [vmem:[#allocation11 + $0x14] sm:$0xf]
          %v939 = vld [vmem:[#allocation11 + $0x18] sm:$0xf]
          %v940 = vld [vmem:[#allocation11 + $0x1c] sm:$0xf]
          %v941 = vld [vmem:[#allocation11 + $0x20] sm:$0xf]
          %v942 = vld [vmem:[#allocation11 + $0x24] sm:$0xf]
          %v943 = vld [vmem:[#allocation11 + $0x28] sm:$0xf]
          %v944 = vld [vmem:[#allocation11 + $0x2c] sm:$0xf]
          %v945 = vld [vmem:[#allocation11 + $0x30] sm:$0xf]
          %v946 = vld [vmem:[#allocation11 + $0x34] sm:$0xf]
          %v947 = vld [vmem:[#allocation11 + $0x38] sm:$0xf]
          %v948 = vld [vmem:[#allocation11 + $0x3c] sm:$0xf]
          %v965 = vunpack.c.l.b16 %v933
          %v966 = vunpack.c.l.b16 %v934
          %v967 = vunpack.c.l.b16 %v935
          %v968 = vunpack.c.l.b16 %v936
          %v969 = vunpack.c.l.b16 %v937
          %v970 = vunpack.c.l.b16 %v938
          %v971 = vunpack.c.l.b16 %v939
          %v972 = vunpack.c.l.b16 %v940
          %v973 = vunpack.c.l.b16 %v941
          %v974 = vunpack.c.l.b16 %v942
          %v975 = vunpack.c.l.b16 %v943
          %v976 = vunpack.c.l.b16 %v944
          %v977 = vunpack.c.l.b16 %v945
          %v978 = vunpack.c.l.b16 %v946
          %v979 = vunpack.c.l.b16 %v947
          %v980 = vunpack.c.l.b16 %v948
          %v981 = vpack.c.b16 %v966, %v965
          %v982 = vpack.c.b16 %v968, %v967
          %v983 = vpack.c.b16 %v970, %v969
          %v984 = vpack.c.b16 %v972, %v971
          %v985 = vpack.c.b16 %v974, %v973
          %v986 = vpack.c.b16 %v976, %v975
          %v987 = vpack.c.b16 %v978, %v977
          %v988 = vpack.c.b16 %v980, %v979
          %997 = vmatprep.subr.bf16.mxu0 0
          %998 = vmatpush1.bf16.msra.mxu0 %v981
          %999 = vmatprep.subr.bf16.mxu0 0
          %1000 = vmatpush1.bf16.msra.mxu0 %v982
          %1001 = vmatprep.subr.bf16.mxu0 0
          %1002 = vmatpush1.bf16.msra.mxu0 %v983
          %1003 = vmatprep.subr.bf16.mxu0 0
          %1004 = vmatpush1.bf16.msra.mxu0 %v984
          %1005 = vmatprep.subr.bf16.mxu0 0
          %1006 = vmatpush1.bf16.msra.mxu0 %v985
          %1007 = vmatprep.subr.bf16.mxu0 0
          %1008 = vmatpush1.bf16.msra.mxu0 %v986
          %1009 = vmatprep.subr.bf16.mxu0 0
          %1010 = vmatpush1.bf16.msra.mxu0 %v987
          %1011 = vmatprep.subr.bf16.mxu0 0
          %1012 = vmatpush1.bf16.msra.mxu0 %v988
          %1013 = vmatprep.subr.bf16.mxu0 0
          %1014 = vmatpush1.bf16.msra.mxu0 0
          %1015 = vmatprep.subr.bf16.mxu0 0
          %1016 = vmatpush1.bf16.msra.mxu0 0
          %1017 = vmatprep.subr.bf16.mxu0 0
          %1018 = vmatpush1.bf16.msra.mxu0 0
          %1019 = vmatprep.subr.bf16.mxu0 0
          %1020 = vmatpush1.bf16.msra.mxu0 0
          %1021 = vmatprep.subr.bf16.mxu0 0
          %1022 = vmatpush1.bf16.msra.mxu0 0
          %1023 = vmatprep.subr.bf16.mxu0 0
          %1024 = vmatpush1.bf16.msra.mxu0 0
          %1025 = vmatprep.subr.bf16.mxu0 0
          %1026 = vmatpush1.bf16.msra.mxu0 0
          %1027 = vmatprep.subr.bf16.mxu0 0
          %1028 = vmatpush1.bf16.msra.mxu0 0
          %1029 = vmatprep.mubr.bf16.mxu0 0
          %1030 = vmatmul.mubr.bf16.gmra.mrb[0].mxu0 %v925
          %v1031 = vpop.f32.mrb[0].mxu0
          %v1032 = vadd.f32 0.0, %v1031
          %v1033 = vpop.f32.mrb[0].mxu0
          %v1034 = vpop.f32.mrb[0].mxu0
          %v1035 = vadd.f32 0.0, %v1034
          %v1036 = vpop.f32.mrb[0].mxu0
          %1037 = vmatprep.mubr.bf16.mxu0 0
          %1038 = vmatmul.mubr.bf16.gmra.mrb[0].mxu0 %v926
          %v1039 = vpop.f32.mrb[0].mxu0
          %v1040 = vadd.f32 0.0, %v1039
          %v1041 = vpop.f32.mrb[0].mxu0
          %v1042 = vpop.f32.mrb[0].mxu0
          %v1043 = vadd.f32 0.0, %v1042
          %v1044 = vpop.f32.mrb[0].mxu0
          %1045 = vmatprep.mubr.bf16.mxu0 0
          %1046 = vmatmul.mubr.bf16.gmra.mrb[0].mxu0 %v927
          %v1047 = vpop.f32.mrb[0].mxu0
          %v1048 = vadd.f32 0.0, %v1047
          %v1049 = vpop.f32.mrb[0].mxu0
          %v1050 = vpop.f32.mrb[0].mxu0
          %v1051 = vadd.f32 0.0, %v1050
          %v1052 = vpop.f32.mrb[0].mxu0
          %1053 = vmatprep.mubr.bf16.mxu0 0
          %1054 = vmatmul.mubr.bf16.gmra.mrb[0].mxu0 %v928
          %v1055 = vpop.f32.mrb[0].mxu0
          %v1056 = vadd.f32 0.0, %v1055
          %v1057 = vpop.f32.mrb[0].mxu0
          %v1058 = vpop.f32.mrb[0].mxu0
          %v1059 = vadd.f32 0.0, %v1058
          %v1060 = vpop.f32.mrb[0].mxu0
          %1061 = vmatprep.mubr.bf16.mxu0 0
          %1062 = vmatmul.mubr.bf16.gmra.mrb[0].mxu0 %v929
          %v1063 = vpop.f32.mrb[0].mxu0
          %v1064 = vadd.f32 0.0, %v1063
          %v1065 = vpop.f32.mrb[0].mxu0
          %v1066 = vpop.f32.mrb[0].mxu0
          %v1067 = vadd.f32 0.0, %v1066
          %v1068 = vpop.f32.mrb[0].mxu0
          %1069 = vmatprep.mubr.bf16.mxu0 0
          %1070 = vmatmul.mubr.bf16.gmra.mrb[0].mxu0 %v930
          %v1071 = vpop.f32.mrb[0].mxu0
          %v1072 = vadd.f32 0.0, %v1071
          %v1073 = vpop.f32.mrb[0].mxu0
          %v1074 = vpop.f32.mrb[0].mxu0
          %v1075 = vadd.f32 0.0, %v1074
          %v1076 = vpop.f32.mrb[0].mxu0
          %1077 = vmatprep.mubr.bf16.mxu0 0
          %1078 = vmatmul.mubr.bf16.gmra.mrb[0].mxu0 %v931
          %v1079 = vpop.f32.mrb[0].mxu0
          %v1080 = vadd.f32 0.0, %v1079
          %v1081 = vpop.f32.mrb[0].mxu0
          %v1082 = vpop.f32.mrb[0].mxu0
          %v1083 = vadd.f32 0.0, %v1082
          %v1084 = vpop.f32.mrb[0].mxu0
          %1085 = vmatprep.mubr.bf16.mxu0 0
          %1086 = vmatmul.mubr.bf16.gmra.mrb[0].mxu0 %v932
          %v1087 = vpop.f32.mrb[0].mxu0
          %v1088 = vadd.f32 0.0, %v1087
          %v1089 = vpop.f32.mrb[0].mxu0
          %v1090 = vpop.f32.mrb[0].mxu0
          %v1091 = vadd.f32 0.0, %v1090
          %v1092 = vpop.f32.mrb[0].mxu0
          %1093 = vdwg.mxu0
          %v1094 = vpack.c.bf16 %v1035, %v1032
          %v1095 = vpack.c.bf16 %v1043, %v1040
          %v1096 = vpack.c.bf16 %v1051, %v1048
          %v1097 = vpack.c.bf16 %v1059, %v1056
          %v1098 = vpack.c.bf16 %v1067, %v1064
          %v1099 = vpack.c.bf16 %v1075, %v1072
          %v1100 = vpack.c.bf16 %v1083, %v1080
          %v1101 = vpack.c.bf16 %v1091, %v1088
          %v1110 = vunpack.c.l.b16 %v1094
          %v1111 = vunpack.c.h.b16 %v1094
          %v1112 = vunpack.c.l.b16 %v1095
          %v1113 = vunpack.c.h.b16 %v1095
          %v1114 = vunpack.c.l.b16 %v1096
          %v1115 = vunpack.c.h.b16 %v1096
          %v1116 = vunpack.c.l.b16 %v1097
          %v1117 = vunpack.c.h.b16 %v1097
          %v1118 = vunpack.c.l.b16 %v1098
          %v1119 = vunpack.c.h.b16 %v1098
          %v1120 = vunpack.c.l.b16 %v1099
          %v1121 = vunpack.c.h.b16 %v1099
          %v1122 = vunpack.c.l.b16 %v1100
          %v1123 = vunpack.c.h.b16 %v1100
          %v1124 = vunpack.c.l.b16 %v1101
          %v1125 = vunpack.c.h.b16 %v1101
          %v1126 = vpack.c.b16 %v1110, %v1110
          %v1127 = vpack.c.b16 %v1111, %v1111
          %v1128 = vpack.c.b16 %v1112, %v1112
          %v1129 = vpack.c.b16 %v1113, %v1113
          %v1130 = vpack.c.b16 %v1114, %v1114
          %v1131 = vpack.c.b16 %v1115, %v1115
          %v1132 = vpack.c.b16 %v1116, %v1116
          %v1133 = vpack.c.b16 %v1117, %v1117
          %v1134 = vpack.c.b16 %v1118, %v1118
          %v1135 = vpack.c.b16 %v1119, %v1119
          %v1136 = vpack.c.b16 %v1120, %v1120
          %v1137 = vpack.c.b16 %v1121, %v1121
          %v1138 = vpack.c.b16 %v1122, %v1122
          %v1139 = vpack.c.b16 %v1123, %v1123
          %v1140 = vpack.c.b16 %v1124, %v1124
          %v1141 = vpack.c.b16 %v1125, %v1125
          %1158 = vst [vmem:[%s315] sm:$0xf] %v1126
          %1159 = vst [vmem:[%s315 + $0x4] sm:$0xf] %v1127
          %1160 = vst [vmem:[%s315 + $0x8] sm:$0xf] %v1128
          %1161 = vst [vmem:[%s315 + $0xc] sm:$0xf] %v1129
          %1162 = vst [vmem:[%s315 + $0x10] sm:$0xf] %v1130
          %1163 = vst [vmem:[%s315 + $0x14] sm:$0xf] %v1131
          %1164 = vst [vmem:[%s315 + $0x18] sm:$0xf] %v1132
          %1165 = vst [vmem:[%s315 + $0x1c] sm:$0xf] %v1133
          %1166 = vst [vmem:[%s315 + $0x20] sm:$0xf] %v1134
          %1167 = vst [vmem:[%s315 + $0x24] sm:$0xf] %v1135
          %1168 = vst [vmem:[%s315 + $0x28] sm:$0xf] %v1136
          %1169 = vst [vmem:[%s315 + $0x2c] sm:$0xf] %v1137
          %1170 = vst [vmem:[%s315 + $0x30] sm:$0xf] %v1138
          %1171 = vst [vmem:[%s315 + $0x34] sm:$0xf] %v1139
          %1172 = vst [vmem:[%s315 + $0x38] sm:$0xf] %v1140
          %1173 = vst [vmem:[%s315 + $0x3c] sm:$0xf] %v1141
        $region68: #{tpu_custom_call.1} parent=39 // pred_fallthru
          _
        %s1174 = sand.u32 %s156, 1
        %s1175 = scalar_lea.sflag [#allocation5], %s1174
        %s1176 = sand.u32 %s156, 1
        %s1177 = smul.addr %s1176, 64
        %s1178 = scalar_lea.vmem [#allocation12], %s1177
        // Predicated region
        $region69: #{tpu_custom_call.1} parent=39 // pred_check
          %p1179 = pneg %p166
        $region70: #{tpu_custom_call.1} parent=39 // pred_check_branch
          %1181 = sbr.rel (%p1179) target = $region72
        $region71: #{tpu_custom_call.1} parent=39 // pred_region
          %s1182 = smul.u32 16, %s28
          %s1184 = ssub.s32 1024, 1024
          %1185 = vsyncadd %s1175, %s1184
          %s1186 = smul.addr %s1182, 64
          %s1187 = scalar_lea.hbm %s5, %s1186
          %s1188 = sshll.u32 %s1178, 4
          %s1189 = int_to_ptr.vmem [resolvable:$true] %s1188
          %1194 = dma.vmem_to_hbm [thread:$0]  %s1189, 1024, %s1187, %s1175, 64, 64, 4
        $region72: #{tpu_custom_call.1} parent=39 // pred_fallthru
          _
      $region40: #{tpu_custom_call.1} parent=5 // pred_fallthru
        _
      %p1195 = scmp.le.s32.totalorder 2, %s19
      // Predicated region
      $region73: #{tpu_custom_call.1} parent=5 // pred_check
        %p1196 = pneg %p1195
      $region74: #{tpu_custom_call.1} parent=5 // pred_check_branch
        %1198 = sbr.rel (%p1196) target = $region76
      $region75: #{tpu_custom_call.1} parent=5 // pred_region
        %s1199 = ssub.s32 %s19, 2
        // Predicated region
        $region77: #{tpu_custom_call.1} parent=75 // pred_check
          %p1200 = pneg %p172
        $region78: #{tpu_custom_call.1} parent=75 // pred_check_branch
          %1202 = sbr.rel (%p1200) target = $region80
        $region79: #{tpu_custom_call.1} parent=75 // pred_region
          %s1203 = sand.u32 %s157, 1
          %s1204 = scalar_lea.sflag [#allocation5], %s1203
          %s1205 = sand.u32 %s157, 1
          %s1206 = smul.addr %s1205, 64
          %s1207 = scalar_lea.vmem [#allocation12], %s1206
          %1208 = dma.done %s1204, 1024
        $region80: #{tpu_custom_call.1} parent=75 // pred_fallthru
          _
      $region76: #{tpu_custom_call.1} parent=5 // pred_fallthru
        _
    $region6: #{tpu_custom_call.1} parent=1 // loop_footer
      %s23 = sadd.s32 1, %s19
    $region7: #{tpu_custom_call.1} parent=1 // loop_footer_branch
      %18 = sbr.rel target = $region3
    $region8: #{tpu_custom_call.1} parent=1 // loop_exit
      _
    %1209 = vsyncpa [#allocation4], 1
    %s1210 = scalar_lea.sflag [#allocation4], 1
    %1211 = vsyncpa %s1210, 1
    %1212 = vsyncpa [#allocation7], 1
    %1213 = vsyncpa [#allocation10], 1
    %1214 = vsyncpa [#allocation5], 1
    %s1215 = scalar_lea.sflag [#allocation5], 1
    %1216 = vsyncpa %s1215, 1

</llo_original>
